<compile_context>
chip_gen: v7x
topology: tpu7x:2x2x1
jax: 0.10.0
libtpu: 0.0.40
codegen_flags: <defaults>
</compile_context>

<pallas_src>
import functools

import jax
import jax.numpy as jnp
from jax.experimental import pallas as pl
from jax.experimental.pallas import tpu as pltpu

D_MODEL = 64
HEADS = 4
D_K = D_MODEL // HEADS
SCALE = float(D_K) ** 0.5          # matches torch.sqrt(torch.tensor(d_k)).item()
LN_EPS = 1e-5                       # torch.nn.LayerNorm default eps


def self_attention_kernel(x_ref, wqkv_ref, bqkv_ref, wout_ref, bout_ref,
                          gamma_ref, beta_ref, o_ref, *, q_chunk, bf16_exp):
    BT, S, D = x_ref.shape
    R = BT * S

    x = x_ref[...].reshape(R, D)                          # (R, 64) f32 (residual)
    x_bf = x.astype(jnp.bfloat16)                         # MXU operand

    # --- QKV projection: one lane-dense (R,64)@(64,192) bf16 MXU matmul ----
    # (1/sqrt(d_k) is already folded into the Q columns by the wrapper.)
    qkv = jnp.dot(x_bf, wqkv_ref[...], preferred_element_type=jnp.float32)
    qkv = (qkv + bqkv_ref[...]).astype(jnp.bfloat16)      # (R, 192) bf16
    qkv = qkv.reshape(BT, S, 3 * D)

    # --- Head regroup into (HEADS*BT, S, D_K); batch index = h*BT + b -------
    def heads_batched(base):
        return jnp.concatenate(
            [qkv[:, :, base + h * D_K: base + (h + 1) * D_K]
             for h in range(HEADS)], axis=0)              # (HB, S, D_K) bf16

    q = heads_batched(0)
    k = heads_batched(D)
    v = heads_batched(2 * D)

    # --- Attention, chunked over query rows ----------------------------------
    # Per-chunk scores are (HB, tq, S): O(S) memory, full score row per query
    # (so a plain softmax is exact; no online recurrence needed).
    n_chunks = -(-S // q_chunk)
    attn_parts = []
    for c in range(n_chunks):
        lo = c * q_chunk
        hi = min(S, lo + q_chunk)
        qc = q[:, lo:hi, :]                               # (HB, tq, D_K) bf16
        s_c = jnp.einsum("bqd,bkd->bqk", qc, k,
                         preferred_element_type=jnp.float32)   # (HB, tq, S) f32
        s_c = s_c - jnp.max(s_c, axis=-1, keepdims=True)
        if bf16_exp:
            p = jnp.exp(s_c.astype(jnp.bfloat16))         # bf16 EUP (v6e / v7x)
        else:
            p = jnp.exp(s_c)                              # f32 EUP (v5e and older)
        denom = jnp.sum(p, axis=-1, keepdims=True, dtype=jnp.float32)
        a_c = jnp.einsum("bqk,bkd->bqd", p.astype(jnp.bfloat16), v,
                         preferred_element_type=jnp.float32)   # (HB, tq, D_K)
        # Post-PV normalization: denom broadcasts over D_K (16) columns instead
        # of S columns -> far fewer VPU multiplies; EUP reciprocal is ~free.
        a_c = a_c * pl.reciprocal(denom, approx=True)
        attn_parts.append(a_c.astype(jnp.bfloat16))
    attn = attn_parts[0] if n_chunks == 1 else jnp.concatenate(attn_parts, axis=1)

    # --- Output projection: one lane concat + single K=64 MXU matmul --------
    attn = attn.reshape(HEADS, BT, S, D_K)
    cat = jnp.concatenate([attn[h] for h in range(HEADS)], axis=-1)   # (BT,S,64)
    out = jnp.dot(cat.reshape(R, D), wout_ref[...],
                  preferred_element_type=jnp.float32) + bout_ref[...]

    # dropout: identity in eval mode
    # --- Residual + LayerNorm over the last dim -------------------------------
    y = out + x
    mean = jnp.mean(y, axis=-1, keepdims=True)
    yc = y - mean
    var = jnp.mean(yc * yc, axis=-1, keepdims=True)
    y = yc * jax.lax.rsqrt(var + LN_EPS)
    y = y * gamma_ref[...] + beta_ref[...]

    o_ref[...] = y.reshape(BT, S, D).astype(o_ref.dtype)


def _round_up(v, m):
    return -(-v // m) * m


def _physical_vmem_bytes():
    try:
        info = pltpu.get_tpu_info()
        cap = getattr(info, "vmem_capacity_bytes", None)
        if cap:
            return int(cap)
    except Exception:
        pass
    return 64 << 20            # conservative (v7x-sized) fallback


def _use_bf16_exp():
    # bf16 exp only pays on v6e/v7x; v5e and older have no bf16 EUP/VPU path.
    try:
        kind = jax.devices()[0].device_kind.lower()
    except Exception:
        return False
    return not any(tag in kind for tag in ("v2", "v3", "v4", "v5"))


def _choose_tiles(B, S, vmem_phys_bytes):
    """Generation-aware batch tile (BT) and query-row chunk (TQ)."""
    big_vmem = vmem_phys_bytes >= (100 << 20)   # v5e/v6e: 128 MiB.  v7x: 64 MiB.
    foot_budget = (22 << 20) if big_vmem else (8 << 20)
    rows_target = 512 if big_vmem else 256
    scores_budget = (4 << 20) if big_vmem else (2 << 20)
    # v7x has 2 TensorCores: keep >= 2 grid steps so "parallel" can shard them.
    bt_cap = B if big_vmem else max(1, B // 2)

    bt = 1
    for cand in range(1, bt_cap + 1):
        if B % cand:
            continue
        rows = cand * S
        act_bytes = rows * D_MODEL * (4 * 9 + 2 * 6)   # f32 + bf16 temporaries
        io_bytes = rows * D_MODEL * 4 * 2 * 2          # double-buffered x + y blocks
        if act_bytes + io_bytes + scores_budget > foot_budget:
            break
        bt = cand
        if rows >= rows_target:
            break

    hb = HEADS * bt
    if S <= 8:
        tq = S
    else:
        per_qrow = hb * S * (4 + 2)                    # f32 scores + bf16 probs
        tq = (scores_budget // max(per_qrow, 1)) // 8 * 8
        tq_floor = _round_up(max(1, (S + 63) // 64), 8)   # bound unrolled chunk count
        tq = int(min(S, max(8, tq_floor, tq)))
    return bt, tq


def self_attention(x, wqkv, bqkv, wout, bout, gamma, beta):
    B, S, D = x.shape
    assert D == D_MODEL

    # Fold 1/sqrt(d_k) into the Q columns of the QKV projection (free) and
    # pre-cast the MXU weights to bf16 (accumulation stays f32 in-kernel).
    col_scale = jnp.concatenate(
        [jnp.full((1, D), 1.0 / SCALE, jnp.float32),
         jnp.ones((1, 2 * D), jnp.float32)], axis=-1)
    wqkv_s = (wqkv.astype(jnp.float32) * col_scale).astype(jnp.bfloat16)
    bqkv_s = bqkv.astype(jnp.float32) * col_scale
    wout_b = wout.astype(jnp.bfloat16)

    vmem_phys = _physical_vmem_bytes()
    BT, TQ = _choose_tiles(B, S, vmem_phys)
    grid = (B // BT,)
    vmem_limit = (96 << 20) if vmem_phys >= (100 << 20) else (40 << 20)

    flops = (2 * B * S * D * 3 * D                 # QKV projection
             + 4 * B * HEADS * S * S * D_K         # QK^T + PV
             + 2 * B * S * D * D)                  # output projection
    transcendentals = B * HEADS * S * S + 2 * B * S
    bytes_accessed = int(2 * x.size * x.dtype.itemsize
                         + wqkv_s.size * 2 + wout_b.size * 2
                         + (bqkv_s.size + bout.size + gamma.size + beta.size) * 4)

    kernel = functools.partial(self_attention_kernel, q_chunk=TQ,
                               bf16_exp=_use_bf16_exp())

    return pl.pallas_call(
        kernel,
        out_shape=jax.ShapeDtypeStruct((B, S, D), x.dtype),
        grid=grid,
        in_specs=[
            pl.BlockSpec((BT, S, D), lambda b: (b, 0, 0)),       # x (batch tile)
            pl.BlockSpec((D, 3 * D), lambda b: (0, 0)),          # Wqkv (scaled, bf16)
            pl.BlockSpec((1, 3 * D), lambda b: (0, 0)),          # bqkv (scaled)
            pl.BlockSpec((D, D), lambda b: (0, 0)),              # Wout (bf16)
            pl.BlockSpec((1, D), lambda b: (0, 0)),              # bout
            pl.BlockSpec((1, D), lambda b: (0, 0)),              # gamma
            pl.BlockSpec((1, D), lambda b: (0, 0)),              # beta
        ],
        out_specs=pl.BlockSpec((BT, S, D), lambda b: (b, 0, 0)),
        compiler_params=pltpu.CompilerParams(
            dimension_semantics=("parallel",),
            vmem_limit_bytes=vmem_limit),
        cost_estimate=pl.CostEstimate(
            flops=flops,
            transcendentals=transcendentals,
            bytes_accessed=bytes_accessed),
    )(x, wqkv_s, bqkv_s, wout_b, bout, gamma, beta)


def reference_forward(x, wqkv, bqkv, wout, bout, gamma, beta):
    """Pure-JAX f32 reference mirroring the PyTorch forward (eval mode)."""
    B, S, D = x.shape
    qkv = x @ wqkv + bqkv                                   # (B, S, 3D)
    q, k, v = jnp.split(qkv, 3, axis=-1)

    def heads(t):
        return t.reshape(B, S, HEADS, D_K).transpose(0, 2, 1, 3)   # (B, H, S, d_k)

    q, k, v = heads(q), heads(k), heads(v)
    a = jnp.einsum("bhqd,bhkd->bhqk", q, k) / SCALE
    a = jax.nn.softmax(a, axis=-1)
    a = jnp.einsum("bhqk,bhkd->bhqd", a, v)
    a = a.transpose(0, 2, 1, 3).reshape(B, S, D)
    a = a @ wout + bout
    y = a + x
    mean = jnp.mean(y, axis=-1, keepdims=True)
    var = jnp.mean((y - mean) ** 2, axis=-1, keepdims=True)
    y = (y - mean) / jnp.sqrt(var + LN_EPS)
    return y * gamma + beta


if __name__ == "__main__":
    B, S = 2, 8
    key = jax.random.PRNGKey(0)
    kx, kw1, kb1, kw2, kb2 = jax.random.split(key, 5)

    x = jax.random.normal(kx, (B, S, D_MODEL), dtype=jnp.float32)
    # deterministic synthetic params (shapes from nn.Linear / nn.LayerNorm)
    wqkv = jax.random.normal(kw1, (D_MODEL, 3 * D_MODEL), dtype=jnp.float32) * 0.05
    bqkv = jax.random.normal(kb1, (1, 3 * D_MODEL), dtype=jnp.float32) * 0.01
    wout = jax.random.normal(kw2, (D_MODEL, D_MODEL), dtype=jnp.float32) * 0.05
    bout = jax.random.normal(kb2, (1, D_MODEL), dtype=jnp.float32) * 0.01
    gamma = jnp.ones((1, D_MODEL), dtype=jnp.float32)
    beta = jnp.zeros((1, D_MODEL), dtype=jnp.float32)

    out = self_attention(x, wqkv, bqkv, wout, bout, gamma, beta)
    out = jax.block_until_ready(out)

    ref = reference_forward(x, wqkv, bqkv, wout, bout, gamma, beta)
    assert out.shape == (B, S, D_MODEL)
    # tolerance covers bf16 MXU inputs / bf16 exp + approximate EUP reciprocal
    assert jnp.allclose(out, ref, atol=2e-2, rtol=2e-2), "mismatch vs JAX reference"

    print("KERNEL_OK")
</pallas_src>

<mosaic_0001>
module attributes {stable_mosaic.version = 11 : i64} {
  func.func @self_attention_kernel(%arg0: i32, %arg1: memref<1x8x64xf32, #tpu.memory_space<vmem>>, %arg2: memref<64x192xbf16, #tpu.memory_space<vmem>>, %arg3: memref<1x192xf32, #tpu.memory_space<vmem>>, %arg4: memref<64x64xbf16, #tpu.memory_space<vmem>>, %arg5: memref<1x64xf32, #tpu.memory_space<vmem>>, %arg6: memref<1x64xf32, #tpu.memory_space<vmem>>, %arg7: memref<1x64xf32, #tpu.memory_space<vmem>>, %arg8: memref<1x8x64xf32, #tpu.memory_space<vmem>>) attributes {dimension_semantics = [#tpu.dimension_semantics<parallel>], iteration_bounds = array<i64: 2>, scalar_prefetch = 0 : i64, scratch_operands = 0 : i64, tpu.core_type = #tpu.core_type<tc>, window_params = [{transform_indices = @transform_0, window_bounds = array<i64: 1, 8, 64>}, {pipeline_mode = #tpu.pipeline_mode<synchronous>, transform_indices = @transform_1, window_bounds = array<i64: 64, 192>}, {pipeline_mode = #tpu.pipeline_mode<synchronous>, transform_indices = @transform_2, window_bounds = array<i64: 1, 192>}, {pipeline_mode = #tpu.pipeline_mode<synchronous>, transform_indices = @transform_3, window_bounds = array<i64: 64, 64>}, {pipeline_mode = #tpu.pipeline_mode<synchronous>, transform_indices = @transform_4, window_bounds = array<i64: 1, 64>}, {pipeline_mode = #tpu.pipeline_mode<synchronous>, transform_indices = @transform_5, window_bounds = array<i64: 1, 64>}, {pipeline_mode = #tpu.pipeline_mode<synchronous>, transform_indices = @transform_6, window_bounds = array<i64: 1, 64>}, {transform_indices = @transform_7, window_bounds = array<i64: 1, 8, 64>}]} {
    %c0 = arith.constant 0 : index
    %c0_0 = arith.constant 0 : index
    %c0_1 = arith.constant 0 : index
    %0 = vector.load %arg1[%c0, %c0_0, %c0_1] : memref<1x8x64xf32, #tpu.memory_space<vmem>>, vector<1x8x64xf32>
    %1 = vector.shape_cast %0 : vector<1x8x64xf32> to vector<8x64xf32>
    %2 = arith.truncf %1 : vector<8x64xf32> to vector<8x64xbf16>
    %c0_2 = arith.constant 0 : index
    %c0_3 = arith.constant 0 : index
    %3 = vector.load %arg2[%c0_2, %c0_3] : memref<64x192xbf16, #tpu.memory_space<vmem>>, vector<64x192xbf16>
    %cst = arith.constant dense<0.000000e+00> : vector<8x192xf32>
    %4 = tpu.matmul %2, %3, %cst {dimension_numbers = #tpu.dot_dimension_numbers<[1], [0], [0], [1], [0, 0, 1, 1], [], []>} : vector<8x64xbf16>, vector<64x192xbf16>, vector<8x192xf32> -> vector<8x192xf32>
    %c0_4 = arith.constant 0 : index
    %c0_5 = arith.constant 0 : index
    %5 = vector.load %arg3[%c0_4, %c0_5] : memref<1x192xf32, #tpu.memory_space<vmem>>, vector<1x192xf32>
    %6 = vector.broadcast %5 : vector<1x192xf32> to vector<8x192xf32>
    %7 = arith.addf %4, %6 : vector<8x192xf32>
    %8 = arith.truncf %7 : vector<8x192xf32> to vector<8x192xbf16>
    %9 = vector.shape_cast %8 : vector<8x192xbf16> to vector<1x8x192xbf16>
    %10 = vector.extract_strided_slice %9 {offsets = [0, 0, 0], sizes = [1, 8, 16], strides = [1, 1, 1]} : vector<1x8x192xbf16> to vector<1x8x16xbf16>
    %11 = vector.extract_strided_slice %9 {offsets = [0, 0, 16], sizes = [1, 8, 16], strides = [1, 1, 1]} : vector<1x8x192xbf16> to vector<1x8x16xbf16>
    %12 = vector.extract_strided_slice %9 {offsets = [0, 0, 32], sizes = [1, 8, 16], strides = [1, 1, 1]} : vector<1x8x192xbf16> to vector<1x8x16xbf16>
    %13 = vector.extract_strided_slice %9 {offsets = [0, 0, 48], sizes = [1, 8, 16], strides = [1, 1, 1]} : vector<1x8x192xbf16> to vector<1x8x16xbf16>
    %14 = tpu.concatenate %10, %11, %12, %13 in 0 : vector<1x8x16xbf16>, vector<1x8x16xbf16>, vector<1x8x16xbf16>, vector<1x8x16xbf16> -> vector<4x8x16xbf16>
    %15 = vector.extract_strided_slice %9 {offsets = [0, 0, 64], sizes = [1, 8, 16], strides = [1, 1, 1]} : vector<1x8x192xbf16> to vector<1x8x16xbf16>
    %16 = vector.extract_strided_slice %9 {offsets = [0, 0, 80], sizes = [1, 8, 16], strides = [1, 1, 1]} : vector<1x8x192xbf16> to vector<1x8x16xbf16>
    %17 = vector.extract_strided_slice %9 {offsets = [0, 0, 96], sizes = [1, 8, 16], strides = [1, 1, 1]} : vector<1x8x192xbf16> to vector<1x8x16xbf16>
    %18 = vector.extract_strided_slice %9 {offsets = [0, 0, 112], sizes = [1, 8, 16], strides = [1, 1, 1]} : vector<1x8x192xbf16> to vector<1x8x16xbf16>
    %19 = tpu.concatenate %15, %16, %17, %18 in 0 : vector<1x8x16xbf16>, vector<1x8x16xbf16>, vector<1x8x16xbf16>, vector<1x8x16xbf16> -> vector<4x8x16xbf16>
    %20 = vector.extract_strided_slice %9 {offsets = [0, 0, 128], sizes = [1, 8, 16], strides = [1, 1, 1]} : vector<1x8x192xbf16> to vector<1x8x16xbf16>
    %21 = vector.extract_strided_slice %9 {offsets = [0, 0, 144], sizes = [1, 8, 16], strides = [1, 1, 1]} : vector<1x8x192xbf16> to vector<1x8x16xbf16>
    %22 = vector.extract_strided_slice %9 {offsets = [0, 0, 160], sizes = [1, 8, 16], strides = [1, 1, 1]} : vector<1x8x192xbf16> to vector<1x8x16xbf16>
    %23 = vector.extract_strided_slice %9 {offsets = [0, 0, 176], sizes = [1, 8, 16], strides = [1, 1, 1]} : vector<1x8x192xbf16> to vector<1x8x16xbf16>
    %24 = tpu.concatenate %20, %21, %22, %23 in 0 : vector<1x8x16xbf16>, vector<1x8x16xbf16>, vector<1x8x16xbf16>, vector<1x8x16xbf16> -> vector<4x8x16xbf16>
    "tpu.trace_start"() <{level = 10 : i32, message = "bqd,bkd->bqk"}> : () -> ()
    %cst_6 = arith.constant dense<0.000000e+00> : vector<4x8x8xf32>
    %25 = tpu.matmul %14, %19, %cst_6 {dimension_numbers = #tpu.dot_dimension_numbers<[2], [2], [1], [1], [0, 0, 0, 1, 1, 1], [0], [0]>} : vector<4x8x16xbf16>, vector<4x8x16xbf16>, vector<4x8x8xf32> -> vector<4x8x8xf32>
    "tpu.trace_stop"() : () -> ()
    %cst_7 = arith.constant dense<0xFF800000> : vector<4x8xf32>
    %26 = vector.multi_reduction <maximumf>, %25, %cst_7 [2] : vector<4x8x8xf32> to vector<4x8xf32>
    %27 = vector.shape_cast %26 : vector<4x8xf32> to vector<4x8x1xf32>
    %28 = vector.broadcast %27 : vector<4x8x1xf32> to vector<4x8x8xf32>
    %29 = arith.subf %25, %28 : vector<4x8x8xf32>
    %30 = arith.truncf %29 : vector<4x8x8xf32> to vector<4x8x8xbf16>
    %31 = math.exp %30 : vector<4x8x8xbf16>
    %32 = arith.extf %31 : vector<4x8x8xbf16> to vector<4x8x8xf32>
    %cst_8 = arith.constant dense<0.000000e+00> : vector<4x8xf32>
    %33 = vector.multi_reduction <add>, %32, %cst_8 [2] : vector<4x8x8xf32> to vector<4x8xf32>
    %34 = vector.shape_cast %33 : vector<4x8xf32> to vector<4x8x1xf32>
    "tpu.trace_start"() <{level = 10 : i32, message = "bqk,bkd->bqd"}> : () -> ()
    %cst_9 = arith.constant dense<0.000000e+00> : vector<4x8x16xf32>
    %35 = tpu.matmul %31, %24, %cst_9 {dimension_numbers = #tpu.dot_dimension_numbers<[2], [1], [1], [2], [0, 0, 0, 1, 1, 2], [0], [0]>} : vector<4x8x8xbf16>, vector<4x8x16xbf16>, vector<4x8x16xf32> -> vector<4x8x16xf32>
    "tpu.trace_stop"() : () -> ()
    %36 = tpu.reciprocal %34 {approx = true} : vector<4x8x1xf32> -> vector<4x8x1xf32>
    %37 = vector.broadcast %36 : vector<4x8x1xf32> to vector<4x8x16xf32>
    %38 = arith.mulf %35, %37 : vector<4x8x16xf32>
    %39 = arith.truncf %38 : vector<4x8x16xf32> to vector<4x8x16xbf16>
    %40 = vector.shape_cast %39 : vector<4x8x16xbf16> to vector<4x1x8x16xbf16>
    %41 = vector.extract_strided_slice %40 {offsets = [0, 0, 0, 0], sizes = [1, 1, 8, 16], strides = [1, 1, 1, 1]} : vector<4x1x8x16xbf16> to vector<1x1x8x16xbf16>
    %42 = vector.shape_cast %41 : vector<1x1x8x16xbf16> to vector<1x8x16xbf16>
    %43 = vector.extract_strided_slice %40 {offsets = [1, 0, 0, 0], sizes = [1, 1, 8, 16], strides = [1, 1, 1, 1]} : vector<4x1x8x16xbf16> to vector<1x1x8x16xbf16>
    %44 = vector.shape_cast %43 : vector<1x1x8x16xbf16> to vector<1x8x16xbf16>
    %45 = vector.extract_strided_slice %40 {offsets = [2, 0, 0, 0], sizes = [1, 1, 8, 16], strides = [1, 1, 1, 1]} : vector<4x1x8x16xbf16> to vector<1x1x8x16xbf16>
    %46 = vector.shape_cast %45 : vector<1x1x8x16xbf16> to vector<1x8x16xbf16>
    %47 = vector.extract_strided_slice %40 {offsets = [3, 0, 0, 0], sizes = [1, 1, 8, 16], strides = [1, 1, 1, 1]} : vector<4x1x8x16xbf16> to vector<1x1x8x16xbf16>
    %48 = vector.shape_cast %47 : vector<1x1x8x16xbf16> to vector<1x8x16xbf16>
    %49 = tpu.concatenate %42, %44, %46, %48 in 2 : vector<1x8x16xbf16>, vector<1x8x16xbf16>, vector<1x8x16xbf16>, vector<1x8x16xbf16> -> vector<1x8x64xbf16>
    %50 = vector.shape_cast %49 : vector<1x8x64xbf16> to vector<8x64xbf16>
    %c0_10 = arith.constant 0 : index
    %c0_11 = arith.constant 0 : index
    %51 = vector.load %arg4[%c0_10, %c0_11] : memref<64x64xbf16, #tpu.memory_space<vmem>>, vector<64x64xbf16>
    %cst_12 = arith.constant dense<0.000000e+00> : vector<8x64xf32>
    %52 = tpu.matmul %50, %51, %cst_12 {dimension_numbers = #tpu.dot_dimension_numbers<[1], [0], [0], [1], [0, 0, 1, 1], [], []>} : vector<8x64xbf16>, vector<64x64xbf16>, vector<8x64xf32> -> vector<8x64xf32>
    %c0_13 = arith.constant 0 : index
    %c0_14 = arith.constant 0 : index
    %53 = vector.load %arg5[%c0_13, %c0_14] : memref<1x64xf32, #tpu.memory_space<vmem>>, vector<1x64xf32>
    %54 = vector.broadcast %53 : vector<1x64xf32> to vector<8x64xf32>
    %55 = arith.addf %52, %54 : vector<8x64xf32>
    %56 = arith.addf %55, %1 : vector<8x64xf32>
    %cst_15 = arith.constant dense<0.000000e+00> : vector<8xf32>
    %57 = vector.multi_reduction <add>, %56, %cst_15 [1] : vector<8x64xf32> to vector<8xf32>
    %58 = vector.shape_cast %57 : vector<8xf32> to vector<8x1xf32>
    %cst_16 = arith.constant 6.400000e+01 : f32
    %59 = vector.broadcast %cst_16 : f32 to vector<8x1xf32>
    %60 = arith.divf %58, %59 : vector<8x1xf32>
    %61 = vector.broadcast %60 : vector<8x1xf32> to vector<8x64xf32>
    %62 = arith.subf %56, %61 : vector<8x64xf32>
    %63 = arith.mulf %62, %62 : vector<8x64xf32>
    %cst_17 = arith.constant dense<0.000000e+00> : vector<8xf32>
    %64 = vector.multi_reduction <add>, %63, %cst_17 [1] : vector<8x64xf32> to vector<8xf32>
    %65 = vector.shape_cast %64 : vector<8xf32> to vector<8x1xf32>
    %cst_18 = arith.constant 6.400000e+01 : f32
    %66 = vector.broadcast %cst_18 : f32 to vector<8x1xf32>
    %67 = arith.divf %65, %66 : vector<8x1xf32>
    %cst_19 = arith.constant 9.99999974E-6 : f32
    %68 = vector.broadcast %cst_19 : f32 to vector<8x1xf32>
    %69 = arith.addf %67, %68 : vector<8x1xf32>
    %70 = math.rsqrt %69 : vector<8x1xf32>
    %71 = vector.broadcast %70 : vector<8x1xf32> to vector<8x64xf32>
    %72 = arith.mulf %62, %71 : vector<8x64xf32>
    %c0_20 = arith.constant 0 : index
    %c0_21 = arith.constant 0 : index
    %73 = vector.load %arg6[%c0_20, %c0_21] : memref<1x64xf32, #tpu.memory_space<vmem>>, vector<1x64xf32>
    %74 = vector.broadcast %73 : vector<1x64xf32> to vector<8x64xf32>
    %75 = arith.mulf %72, %74 : vector<8x64xf32>
    %c0_22 = arith.constant 0 : index
    %c0_23 = arith.constant 0 : index
    %76 = vector.load %arg7[%c0_22, %c0_23] : memref<1x64xf32, #tpu.memory_space<vmem>>, vector<1x64xf32>
    %77 = vector.broadcast %76 : vector<1x64xf32> to vector<8x64xf32>
    %78 = arith.addf %75, %77 : vector<8x64xf32>
    %79 = vector.shape_cast %78 : vector<8x64xf32> to vector<1x8x64xf32>
    %c0_24 = arith.constant 0 : index
    %c0_25 = arith.constant 0 : index
    %c0_26 = arith.constant 0 : index
    %80 = vector.load %arg8[%c0_24, %c0_25, %c0_26] : memref<1x8x64xf32, #tpu.memory_space<vmem>>, vector<1x8x64xf32>
    tpu.vector_store %arg8[%c0_24, %c0_25, %c0_26], %79 {strides = array<i32>} : memref<1x8x64xf32, #tpu.memory_space<vmem>>, vector<1x8x64xf32>,
    return
  }
  func.func @transform_0(%arg0: i32) -> (i32, i32, i32) {
    %c0_i32 = arith.constant 0 : i32
    %c0_i32_0 = arith.constant 0 : i32
    %c0_i32_1 = arith.constant 0 : i32
    return %arg0, %c0_i32, %c0_i32_0 : i32, i32, i32
  }
  func.func @transform_1(%arg0: i32) -> (i32, i32) {
    %c0_i32 = arith.constant 0 : i32
    %c0_i32_0 = arith.constant 0 : i32
    %c0_i32_1 = arith.constant 0 : i32
    return %c0_i32, %c0_i32_0 : i32, i32
  }
  func.func @transform_2(%arg0: i32) -> (i32, i32) {
    %c0_i32 = arith.constant 0 : i32
    %c0_i32_0 = arith.constant 0 : i32
    %c0_i32_1 = arith.constant 0 : i32
    return %c0_i32, %c0_i32_0 : i32, i32
  }
  func.func @transform_3(%arg0: i32) -> (i32, i32) {
    %c0_i32 = arith.constant 0 : i32
    %c0_i32_0 = arith.constant 0 : i32
    %c0_i32_1 = arith.constant 0 : i32
    return %c0_i32, %c0_i32_0 : i32, i32
  }
  func.func @transform_4(%arg0: i32) -> (i32, i32) {
    %c0_i32 = arith.constant 0 : i32
    %c0_i32_0 = arith.constant 0 : i32
    %c0_i32_1 = arith.constant 0 : i32
    return %c0_i32, %c0_i32_0 : i32, i32
  }
  func.func @transform_5(%arg0: i32) -> (i32, i32) {
    %c0_i32 = arith.constant 0 : i32
    %c0_i32_0 = arith.constant 0 : i32
    %c0_i32_1 = arith.constant 0 : i32
    return %c0_i32, %c0_i32_0 : i32, i32
  }
  func.func @transform_6(%arg0: i32) -> (i32, i32) {
    %c0_i32 = arith.constant 0 : i32
    %c0_i32_0 = arith.constant 0 : i32
    %c0_i32_1 = arith.constant 0 : i32
    return %c0_i32, %c0_i32_0 : i32, i32
  }
  func.func @transform_7(%arg0: i32) -> (i32, i32, i32) {
    %c0_i32 = arith.constant 0 : i32
    %c0_i32_0 = arith.constant 0 : i32
    %c0_i32_1 = arith.constant 0 : i32
    return %arg0, %c0_i32, %c0_i32_0 : i32, i32, i32
  }
}

</mosaic_0001>

<llo_original>
// kernel: tpu_custom_call.1
$region0: #{tpu_custom_call.1}
  #allocation0 [shape = 'u32[]', space=smem, size = 0x4, offset = 0x4, fixed_abs, tag = 'smem constant byte address 0x4 - core index']
  #allocation1 [shape = 'u32[144,128]{1,0:T(1,128)}', space=vmem, size = 0x12000, scoped, tag = 'internal scratch']
  %s0 = inlined_call_operand.hbm [shape: f32[2,8,64], index: 0, kind: input, shape index: {}]
  %s1 = inlined_call_operand.hbm [shape: bf16[64,192], index: 1, kind: input, shape index: {}]
  %s2 = inlined_call_operand.vmem [shape: f32[1,192], index: 2, kind: input, shape index: {}]
  %s3 = inlined_call_operand.hbm [shape: bf16[64,64], index: 3, kind: input, shape index: {}]
  %s4 = inlined_call_operand.vmem [shape: f32[1,64], index: 4, kind: input, shape index: {}]
  %s5 = inlined_call_operand.vmem [shape: f32[1,64], index: 5, kind: input, shape index: {}]
  %s6 = inlined_call_operand.vmem [shape: f32[1,64], index: 6, kind: input, shape index: {}]
  %s7 = inlined_call_operand.hbm [shape: f32[2,8,64], index: 7, kind: output, shape index: {}]
  %s8 = sld [smem:[#allocation0]]
  $region73: #{tpu_custom_call.1} parent=0
    _
  %s10 = ssub.s32 1, %s8
  %s11 = scalar_select 0, %s10, %s8
  $region1: #{tpu_custom_call.1} parent=0
    #allocation2 [shape = 'u8[8192]{0}', space=vmem, size = 0x2000, scoped, tag = 'input window, operand 0']
    #allocation3 [shape = 's32[2]{0}', space=sflag, size = 0x8, scoped, tag = 'scoped memory for tpu_custom_call.1']
    #allocation4 [shape = 's32[2]{0}', space=sflag, size = 0x8, scoped, tag = 'scoped memory for tpu_custom_call.1']
    #allocation5 [shape = 'u8[32768]{0}', space=vmem, size = 0x8000, scoped, tag = 'input window, operand 1, single buffered']
    #allocation6 [shape = 's32[1]{0}', space=sflag, size = 0x4, scoped, tag = 'scoped memory for tpu_custom_call.1']
    #allocation7 [shape = 'u8[16384]{0}', space=vmem, size = 0x4000, scoped, tag = 'input window, operand 3, single buffered']
    #allocation8 [shape = 'u8[8192]{0}', space=vmem, size = 0x2000, scoped, tag = 'output window, operand 0']
    %12 = vsyncpa [#allocation3], 0
    %s13 = scalar_lea.sflag [#allocation3], 1
    %14 = vsyncpa %s13, 0
    %15 = vsyncpa [#allocation6], 0
    %16 = vsyncpa [#allocation4], 0
    %s17 = scalar_lea.sflag [#allocation4], 1
    %18 = vsyncpa %s17, 0
    loop: start=0, step=1, limit=4
    $region2: #{tpu_custom_call.1} parent=1 // loop_pre_header
      _
    $region3: #{tpu_custom_call.1} parent=1 // loop_header
      %s20 = sphi 0, %s24
      %p21 = scmp.ge.s32.totalorder %s20, 4
      %s30 = sphi 0, %s32
      %s33 = sphi 0, %s30
      %s34 = sphi 0, %s33
      %s50 = sphi 0, %s34
      %s54 = sphi 0, %s54
      %s56 = sphi 0, %s54
      %s57 = sphi 0, %s56
      %s71 = sphi 0, %s57
      %s75 = sphi 0, %s75
      %s77 = sphi 0, %s75
      %s78 = sphi 0, %s77
      %s92 = sphi 0, %s78
      %s96 = sphi 0, %s96
      %s98 = sphi 0, %s96
      %s99 = sphi 0, %s98
      %s113 = sphi 0, %s99
      %s117 = sphi 0, %s117
      %s119 = sphi 0, %s117
      %s120 = sphi 0, %s119
      %s134 = sphi 0, %s120
      %s138 = sphi 0, %s138
      %s140 = sphi 0, %s138
      %s141 = sphi 0, %s140
      %s155 = sphi 0, %s141
      %s159 = sphi 0, %s159
      %s161 = sphi 0, %s159
      %s162 = sphi 0, %s161
      %s176 = sphi 0, %s162
      %s182 = sphi 0, %s184
      %s185 = sphi 0, %s182
      %s186 = sphi 0, %s185
      %s202 = sphi 0, %s186
    $region4: #{tpu_custom_call.1} parent=1 // loop_header_branch
      %23 = sbr.rel (%p21) target = $region8
    $region5: #{tpu_custom_call.1} parent=1 // loop_body
      %s25 = ssub.s32 %s20, 1
      %s26 = ssub.s32 %s20, 2
      %s27 = sadd.s32 %s20, 1
      %s28 = ssub.s32 %s20, %s27
      %p29 = scmp.eq.s32.totalorder %s28, 0
      %s31 = sadd.s32 %s30, 1
      %s32 = scalar_select %p29, %s30, %s31
      %p35 = pneg %p29
      %p36 = scmp.eq.s32.totalorder %s20, 1
      %p37 = por %p35, %p36
      %p38 = scmp.ne.s32.totalorder %s30, %s33
      %p39 = scmp.eq.s32.totalorder %s20, 0
      %p40 = por %p38, %p39
      %p41 = scmp.ne.s32.totalorder %s30, %s33
      %p42 = scmp.eq.s32.totalorder %s25, 1
      %p43 = por %p41, %p42
      %p44 = scmp.ne.s32.totalorder %s33, %s34
      %p45 = scmp.eq.s32.totalorder %s25, 0
      %p46 = por %p44, %p45
      %p47 = scmp.ne.s32.totalorder %s33, %s34
      %p48 = scmp.eq.s32.totalorder %s26, 1
      %p49 = por %p47, %p48
      %p51 = scmp.ne.s32.totalorder %s34, %s50
      %p52 = scmp.eq.s32.totalorder %s26, 0
      %p53 = por %p51, %p52
      %s55 = sadd.s32 %s54, 1
      %p58 = scmp.eq.s32.totalorder %s20, 1
      %p59 = scmp.ne.s32.totalorder %s54, %s56
      %p60 = scmp.eq.s32.totalorder %s20, 0
      %p61 = por %p59, %p60
      %p62 = scmp.ne.s32.totalorder %s54, %s56
      %p63 = scmp.eq.s32.totalorder %s25, 1
      %p64 = por %p62, %p63
      %p65 = scmp.ne.s32.totalorder %s56, %s57
      %p66 = scmp.eq.s32.totalorder %s25, 0
      %p67 = por %p65, %p66
      %p68 = scmp.ne.s32.totalorder %s56, %s57
      %p69 = scmp.eq.s32.totalorder %s26, 1
      %p70 = por %p68, %p69
      %p72 = scmp.ne.s32.totalorder %s57, %s71
      %p73 = scmp.eq.s32.totalorder %s26, 0
      %p74 = por %p72, %p73
      %s76 = sadd.s32 %s75, 1
      %p79 = scmp.eq.s32.totalorder %s20, 1
      %p80 = scmp.ne.s32.totalorder %s75, %s77
      %p81 = scmp.eq.s32.totalorder %s20, 0
      %p82 = por %p80, %p81
      %p83 = scmp.ne.s32.totalorder %s75, %s77
      %p84 = scmp.eq.s32.totalorder %s25, 1
      %p85 = por %p83, %p84
      %p86 = scmp.ne.s32.totalorder %s77, %s78
      %p87 = scmp.eq.s32.totalorder %s25, 0
      %p88 = por %p86, %p87
      %p89 = scmp.ne.s32.totalorder %s77, %s78
      %p90 = scmp.eq.s32.totalorder %s26, 1
      %p91 = por %p89, %p90
      %p93 = scmp.ne.s32.totalorder %s78, %s92
      %p94 = scmp.eq.s32.totalorder %s26, 0
      %p95 = por %p93, %p94
      %s97 = sadd.s32 %s96, 1
      %p100 = scmp.eq.s32.totalorder %s20, 1
      %p101 = scmp.ne.s32.totalorder %s96, %s98
      %p102 = scmp.eq.s32.totalorder %s20, 0
      %p103 = por %p101, %p102
      %p104 = scmp.ne.s32.totalorder %s96, %s98
      %p105 = scmp.eq.s32.totalorder %s25, 1
      %p106 = por %p104, %p105
      %p107 = scmp.ne.s32.totalorder %s98, %s99
      %p108 = scmp.eq.s32.totalorder %s25, 0
      %p109 = por %p107, %p108
      %p110 = scmp.ne.s32.totalorder %s98, %s99
      %p111 = scmp.eq.s32.totalorder %s26, 1
      %p112 = por %p110, %p111
      %p114 = scmp.ne.s32.totalorder %s99, %s113
      %p115 = scmp.eq.s32.totalorder %s26, 0
      %p116 = por %p114, %p115
      %s118 = sadd.s32 %s117, 1
      %p121 = scmp.eq.s32.totalorder %s20, 1
      %p122 = scmp.ne.s32.totalorder %s117, %s119
      %p123 = scmp.eq.s32.totalorder %s20, 0
      %p124 = por %p122, %p123
      %p125 = scmp.ne.s32.totalorder %s117, %s119
      %p126 = scmp.eq.s32.totalorder %s25, 1
      %p127 = por %p125, %p126
      %p128 = scmp.ne.s32.totalorder %s119, %s120
      %p129 = scmp.eq.s32.totalorder %s25, 0
      %p130 = por %p128, %p129
      %p131 = scmp.ne.s32.totalorder %s119, %s120
      %p132 = scmp.eq.s32.totalorder %s26, 1
      %p133 = por %p131, %p132
      %p135 = scmp.ne.s32.totalorder %s120, %s134
      %p136 = scmp.eq.s32.totalorder %s26, 0
      %p137 = por %p135, %p136
      %s139 = sadd.s32 %s138, 1
      %p142 = scmp.eq.s32.totalorder %s20, 1
      %p143 = scmp.ne.s32.totalorder %s138, %s140
      %p144 = scmp.eq.s32.totalorder %s20, 0
      %p145 = por %p143, %p144
      %p146 = scmp.ne.s32.totalorder %s138, %s140
      %p147 = scmp.eq.s32.totalorder %s25, 1
      %p148 = por %p146, %p147
      %p149 = scmp.ne.s32.totalorder %s140, %s141
      %p150 = scmp.eq.s32.totalorder %s25, 0
      %p151 = por %p149, %p150
      %p152 = scmp.ne.s32.totalorder %s140, %s141
      %p153 = scmp.eq.s32.totalorder %s26, 1
      %p154 = por %p152, %p153
      %p156 = scmp.ne.s32.totalorder %s141, %s155
      %p157 = scmp.eq.s32.totalorder %s26, 0
      %p158 = por %p156, %p157
      %s160 = sadd.s32 %s159, 1
      %p163 = scmp.eq.s32.totalorder %s20, 1
      %p164 = scmp.ne.s32.totalorder %s159, %s161
      %p165 = scmp.eq.s32.totalorder %s20, 0
      %p166 = por %p164, %p165
      %p167 = scmp.ne.s32.totalorder %s159, %s161
      %p168 = scmp.eq.s32.totalorder %s25, 1
      %p169 = por %p167, %p168
      %p170 = scmp.ne.s32.totalorder %s161, %s162
      %p171 = scmp.eq.s32.totalorder %s25, 0
      %p172 = por %p170, %p171
      %p173 = scmp.ne.s32.totalorder %s161, %s162
      %p174 = scmp.eq.s32.totalorder %s26, 1
      %p175 = por %p173, %p174
      %p177 = scmp.ne.s32.totalorder %s162, %s176
      %p178 = scmp.eq.s32.totalorder %s26, 0
      %p179 = por %p177, %p178
      %s180 = ssub.s32 %s20, %s27
      %p181 = scmp.eq.s32.totalorder %s180, 0
      %s183 = sadd.s32 %s182, 1
      %s184 = scalar_select %p181, %s182, %s183
      %p187 = pneg %p181
      %p188 = scmp.eq.s32.totalorder %s20, 1
      %p189 = por %p187, %p188
      %p190 = scmp.ne.s32.totalorder %s182, %s185
      %p191 = scmp.eq.s32.totalorder %s20, 0
      %p192 = por %p190, %p191
      %p193 = scmp.ne.s32.totalorder %s182, %s185
      %p194 = scmp.eq.s32.totalorder %s25, 1
      %p195 = por %p193, %p194
      %p196 = scmp.ne.s32.totalorder %s185, %s186
      %p197 = scmp.eq.s32.totalorder %s25, 0
      %p198 = por %p196, %p197
      %p199 = scmp.ne.s32.totalorder %s185, %s186
      %p200 = scmp.eq.s32.totalorder %s26, 1
      %p201 = por %p199, %p200
      %p203 = scmp.ne.s32.totalorder %s186, %s202
      %p204 = scmp.eq.s32.totalorder %s26, 0
      %p205 = por %p203, %p204
      %p206 = scmp.le.s32.totalorder 1, %s20
      %p207 = scmp.lt.s32.totalorder %s20, 3
      %p208 = pnand %p206, %p207
      %p209 = pneg %p208
      // Predicated region
      $region9: #{tpu_custom_call.1} parent=5 // pred_check
        _
      $region10: #{tpu_custom_call.1} parent=5 // pred_check_branch
        %211 = sbr.rel (%p208) target = $region12
      $region11: #{tpu_custom_call.1} parent=5 // pred_region
        %s212 = ssub.s32 %s20, 1
        // Predicated region
        $region13: #{tpu_custom_call.1} parent=11 // pred_check
          %p213 = pneg %p67
        $region14: #{tpu_custom_call.1} parent=11 // pred_check_branch
          %215 = sbr.rel (%p213) target = $region16
        $region15: #{tpu_custom_call.1} parent=11 // pred_region
          %s217 = ssub.s32 1024, 1024
          %218 = vsyncadd [#allocation6], %s217
          %s219 = sshll.u32 [#allocation5], 4
          %s220 = int_to_ptr.vmem [resolvable:$true] %s219
          %225 = dma.hbm_to_vmem [thread:$0]  %s1, 1024, %s220, [#allocation6], 128, 128, 8
        $region16: #{tpu_custom_call.1} parent=11 // pred_fallthru
          _
        // Predicated region
        $region17: #{tpu_custom_call.1} parent=11 // pred_check
          %p226 = pneg %p88
        $region18: #{tpu_custom_call.1} parent=11 // pred_check_branch
          %228 = sbr.rel (%p226) target = $region20
        $region19: #{tpu_custom_call.1} parent=11 // pred_region
          _
        $region20: #{tpu_custom_call.1} parent=11 // pred_fallthru
          _
        // Predicated region
        $region21: #{tpu_custom_call.1} parent=11 // pred_check
          %p229 = pneg %p109
        $region22: #{tpu_custom_call.1} parent=11 // pred_check_branch
          %231 = sbr.rel (%p229) target = $region24
        $region23: #{tpu_custom_call.1} parent=11 // pred_region
          %s233 = ssub.s32 512, 512
          %234 = vsyncadd [#allocation6], %s233
          %s235 = sshll.u32 [#allocation7], 4
          %s236 = int_to_ptr.vmem [resolvable:$true] %s235
          %241 = dma.hbm_to_vmem [thread:$0]  %s3, 512, %s236, [#allocation6], 64, 64, 4
        $region24: #{tpu_custom_call.1} parent=11 // pred_fallthru
          _
        // Predicated region
        $region25: #{tpu_custom_call.1} parent=11 // pred_check
          %p242 = pneg %p130
        $region26: #{tpu_custom_call.1} parent=11 // pred_check_branch
          %244 = sbr.rel (%p242) target = $region28
        $region27: #{tpu_custom_call.1} parent=11 // pred_region
          _
        $region28: #{tpu_custom_call.1} parent=11 // pred_fallthru
          _
        // Predicated region
        $region29: #{tpu_custom_call.1} parent=11 // pred_check
          %p245 = pneg %p151
        $region30: #{tpu_custom_call.1} parent=11 // pred_check_branch
          %247 = sbr.rel (%p245) target = $region32
        $region31: #{tpu_custom_call.1} parent=11 // pred_region
          _
        $region32: #{tpu_custom_call.1} parent=11 // pred_fallthru
          _
        // Predicated region
        $region33: #{tpu_custom_call.1} parent=11 // pred_check
          %p248 = pneg %p172
        $region34: #{tpu_custom_call.1} parent=11 // pred_check_branch
          %250 = sbr.rel (%p248) target = $region36
        $region35: #{tpu_custom_call.1} parent=11 // pred_region
          _
        $region36: #{tpu_custom_call.1} parent=11 // pred_fallthru
          _
      $region12: #{tpu_custom_call.1} parent=5 // pred_fallthru
        _
      %p251 = scmp.lt.s32.totalorder %s20, 2
      // Predicated region
      $region37: #{tpu_custom_call.1} parent=5 // pred_check
        %p252 = pneg %p251
      $region38: #{tpu_custom_call.1} parent=5 // pred_check_branch
        %254 = sbr.rel (%p252) target = $region40
      $region39: #{tpu_custom_call.1} parent=5 // pred_region
        // Predicated region
        $region41: #{tpu_custom_call.1} parent=39 // pred_check
          %p255 = pneg %p40
        $region42: #{tpu_custom_call.1} parent=39 // pred_check_branch
          %257 = sbr.rel (%p255) target = $region44
        $region43: #{tpu_custom_call.1} parent=39 // pred_region
          %s258 = sand.u32 %s30, 1
          %s259 = scalar_lea.sflag [#allocation3], %s258
          %s260 = sand.u32 %s30, 1
          %s261 = smul.addr %s260, 8
          %s262 = scalar_lea.vmem [#allocation2], %s261
          %s264 = ssub.s32 128, 128
          %265 = vsyncadd %s259, %s264
          %s266 = smul.addr %s20, 128
          %s267 = scalar_lea.hbm %s0, %s266
          %s269 = sshll.u32 %s262, 4
          %s270 = int_to_ptr.vmem [resolvable:$true] %s269
          %272 = dma.hbm_to_vmem [thread:$0]  %s267, 128, %s270, %s259
        $region44: #{tpu_custom_call.1} parent=39 // pred_fallthru
          _
      $region40: #{tpu_custom_call.1} parent=5 // pred_fallthru
        _
      %p273 = scmp.le.s32.totalorder 1, %s20
      %p274 = scmp.lt.s32.totalorder %s20, 3
      %p275 = pnand %p273, %p274
      %p276 = pneg %p275
      // Predicated region
      $region45: #{tpu_custom_call.1} parent=5 // pred_check
        _
      $region46: #{tpu_custom_call.1} parent=5 // pred_check_branch
        %278 = sbr.rel (%p275) target = $region48
      $region47: #{tpu_custom_call.1} parent=5 // pred_region
        %s279 = ssub.s32 %s20, 1
        %s280 = sand.u32 %s33, 1
        %s281 = scalar_lea.sflag [#allocation3], %s280
        %s282 = sand.u32 %s33, 1
        %s283 = smul.addr %s282, 8
        %s284 = scalar_lea.vmem [#allocation2], %s283
        // Predicated region
        $region49: #{tpu_custom_call.1} parent=47 // pred_check
          %p285 = pneg %p46
        $region50: #{tpu_custom_call.1} parent=47 // pred_check_branch
          %287 = sbr.rel (%p285) target = $region52
        $region51: #{tpu_custom_call.1} parent=47 // pred_region
          %288 = dma.done %s281, 128
        $region52: #{tpu_custom_call.1} parent=47 // pred_fallthru
          _
        // Predicated region
        $region53: #{tpu_custom_call.1} parent=47 // pred_check
          %p289 = pneg %p67
        $region54: #{tpu_custom_call.1} parent=47 // pred_check_branch
          %291 = sbr.rel (%p289) target = $region56
        $region55: #{tpu_custom_call.1} parent=47 // pred_region
          %292 = dma.done [#allocation6], 1024
        $region56: #{tpu_custom_call.1} parent=47 // pred_fallthru
          _
        // Predicated region
        $region57: #{tpu_custom_call.1} parent=47 // pred_check
          %p293 = pneg %p109
        $region58: #{tpu_custom_call.1} parent=47 // pred_check_branch
          %295 = sbr.rel (%p293) target = $region60
        $region59: #{tpu_custom_call.1} parent=47 // pred_region
          %296 = dma.done [#allocation6], 512
        $region60: #{tpu_custom_call.1} parent=47 // pred_fallthru
          _
        %s297 = sand.u32 %s33, 1
        %s298 = scalar_lea.sflag [#allocation3], %s297
        %s299 = sand.u32 %s33, 1
        %s300 = smul.addr %s299, 8
        %s301 = scalar_lea.vmem [#allocation2], %s300
        %p302 = pneg %p46
        %p303 = pneg %p43
        %p304 = pneg %p67
        %p305 = pneg %p64
        %p306 = pneg %p88
        %p307 = pneg %p85
        %p308 = pneg %p109
        %p309 = pneg %p106
        %p310 = pneg %p130
        %p311 = pneg %p127
        %p312 = pneg %p151
        %p313 = pneg %p148
        %p314 = pneg %p172
        %p315 = pneg %p169
        %p316 = pneg %p198
        %p317 = pneg %p195
        %s318 = sand.u32 %s185, 1
        %s319 = scalar_lea.sflag [#allocation4], %s318
        %s320 = sand.u32 %s185, 1
        %s321 = smul.addr %s320, 8
        %s322 = scalar_lea.vmem [#allocation8], %s321
        %v324 = vld [vmem:[%s284] sm:$0xff]
        %v325 = vpack.c.bf16 %v324, %v324
        %v326 = vld [vmem:[#allocation5] sm:$0xff]
        %v327 = vld [vmem:[#allocation5 + $0x8] sm:$0xff]
        %v328 = vld [vmem:[#allocation5 + $0x10] sm:$0xff]
        %v329 = vld [vmem:[#allocation5 + $0x18] sm:$0xff]
        %v330 = vld [vmem:[#allocation5 + $0x20] sm:$0xff]
        %v331 = vld [vmem:[#allocation5 + $0x28] sm:$0xff]
        %v332 = vld [vmem:[#allocation5 + $0x30] sm:$0xff]
        %v333 = vld [vmem:[#allocation5 + $0x38] sm:$0xff]
        %v334 = vld [vmem:[%s2] sm:$0x3]
        %v336 = vlaneseq
        %v337 = vshrl.u32 %v336, 7
        %v338 = vsub.s32 0, %v337
        %v339 = vrot.slane %v334, %v338
        %v340 = vlaneseq
        %v341 = vshrl.u32 %v340, 7
        %v342 = vsub.s32 1, %v341
        %v343 = vrot.slane %v334, %v342
        %v354 = vunpack.c.l.b16 %v326
        %v355 = vunpack.c.h.b16 %v326
        %v356 = vunpack.c.l.b16 %v327
        %v357 = vunpack.c.h.b16 %v327
        %v358 = vunpack.c.l.b16 %v328
        %v359 = vunpack.c.h.b16 %v328
        %v360 = vunpack.c.l.b16 %v329
        %v361 = vunpack.c.h.b16 %v329
        %v362 = vunpack.c.l.b16 %v330
        %v363 = vunpack.c.h.b16 %v330
        %v364 = vunpack.c.l.b16 %v331
        %v365 = vunpack.c.h.b16 %v331
        %v366 = vunpack.c.l.b16 %v332
        %v367 = vunpack.c.h.b16 %v332
        %v368 = vunpack.c.l.b16 %v333
        %v369 = vunpack.c.h.b16 %v333
        %v370 = vpack.c.b16 %v356, %v354
        %v371 = vpack.c.b16 %v357, %v355
        %v372 = vpack.c.b16 %v360, %v358
        %v373 = vpack.c.b16 %v361, %v359
        %v374 = vpack.c.b16 %v364, %v362
        %v375 = vpack.c.b16 %v365, %v363
        %v376 = vpack.c.b16 %v368, %v366
        %v377 = vpack.c.b16 %v369, %v367
        %vm386 = vcmask 523264
        %v388 = vsel %vm386, %v325, 0
        %390 = vmatprep.subr.bf16.mxu0 %v371
        %391 = vmatpush1.bf16.msra.mxu0 %v370
        %392 = vmatprep.subr.bf16.mxu0 %v373
        %393 = vmatpush1.bf16.msra.mxu0 %v372
        %394 = vmatprep.subr.bf16.mxu0 %v375
        %395 = vmatpush1.bf16.msra.mxu0 %v374
        %396 = vmatprep.subr.bf16.mxu0 %v377
        %397 = vmatpush1.bf16.msra.mxu0 %v376
        %398 = vmatprep.subr.bf16.mxu0 0
        %399 = vmatpush1.bf16.msra.mxu0 0
        %400 = vmatprep.subr.bf16.mxu0 0
        %401 = vmatpush1.bf16.msra.mxu0 0
        %402 = vmatprep.subr.bf16.mxu0 0
        %403 = vmatpush1.bf16.msra.mxu0 0
        %404 = vmatprep.subr.bf16.mxu0 0
        %405 = vmatpush1.bf16.msra.mxu0 0
        %406 = vmatprep.subr.bf16.mxu0 0
        %407 = vmatpush1.bf16.msra.mxu0 0
        %408 = vmatprep.subr.bf16.mxu0 0
        %409 = vmatpush1.bf16.msra.mxu0 0
        %410 = vmatprep.subr.bf16.mxu0 0
        %411 = vmatpush1.bf16.msra.mxu0 0
        %412 = vmatprep.subr.bf16.mxu0 0
        %413 = vmatpush1.bf16.msra.mxu0 0
        %414 = vmatprep.subr.bf16.mxu0 0
        %415 = vmatpush1.bf16.msra.mxu0 0
        %416 = vmatprep.subr.bf16.mxu0 0
        %417 = vmatpush1.bf16.msra.mxu0 0
        %418 = vmatprep.subr.bf16.mxu0 0
        %419 = vmatpush1.bf16.msra.mxu0 0
        %420 = vmatprep.subr.bf16.mxu0 0
        %421 = vmatpush1.bf16.msra.mxu0 0
        %422 = vmatprep.mubr.bf16.mxu0 0
        %423 = vmatmul.mubr.bf16.gmra.mrb[0].mxu0 %v388
        %v424 = vpop.f32.mrb[0].mxu0
        %v425 = vadd.f32 %v339, %v424
        %v426 = vpop.f32.mrb[0].mxu0
        %v427 = vadd.f32 %v343, %v426
        %v428 = vpop.f32.mrb[0].mxu0
        %v429 = vpop.f32.mrb[0].mxu0
        %430 = vdwg.mxu0
        %v431 = vpack.c.bf16 %v425, %v425
        %v432 = vpack.c.bf16 %v427, %v427
        %434 = vrot.lane.b32.xlu0 %v431, 112
        %v435 = vpop.permute.xlu0 %434
        %436 = vrot.lane.b32.xlu0 %v431, 96
        %v437 = vpop.permute.xlu0 %436
        %438 = vrot.lane.b32.xlu0 %v431, 80
        %v439 = vpop.permute.xlu0 %438
        %441 = vrot.lane.b32.xlu0 %v432, 112
        %v442 = vpop.permute.xlu0 %441
        %443 = vrot.lane.b32.xlu0 %v432, 96
        %v444 = vpop.permute.xlu0 %443
        %445 = vrot.lane.b32.xlu0 %v432, 80
        %v446 = vpop.permute.xlu0 %445
        %447 = vrot.lane.b32.xlu0 %v431, 64
        %v448 = vpop.permute.xlu0 %447
        %vm449 = vcmask 130048
        %v451 = vsel %vm449, %v431, 0
        %v454 = vsel %vm449, %v448, 0
        %456 = vmatprep.subr.bf16.mxu0 0
        %457 = vmatpush1.bf16.xpose.msra.mxu0 %v454
        %458 = vmatprep.subr.bf16.mxu0 0
        %459 = vmatpush1.bf16.xpose.msra.mxu0 0
        %460 = vmatprep.subr.bf16.mxu0 0
        %461 = vmatpush1.bf16.xpose.msra.mxu0 0
        %462 = vmatprep.subr.bf16.mxu0 0
        %463 = vmatpush1.bf16.xpose.msra.mxu0 0
        %464 = vmatprep.subr.bf16.mxu0 0
        %465 = vmatpush1.bf16.xpose.msra.mxu0 0
        %466 = vmatprep.subr.bf16.mxu0 0
        %467 = vmatpush1.bf16.xpose.msra.mxu0 0
        %468 = vmatprep.subr.bf16.mxu0 0
        %469 = vmatpush1.bf16.xpose.msra.mxu0 0
        %470 = vmatprep.subr.bf16.mxu0 0
        %471 = vmatpush1.bf16.xpose.msra.mxu0 0
        %472 = vmatprep.subr.bf16.mxu0 0
        %473 = vmatpush1.bf16.xpose.msra.mxu0 0
        %474 = vmatprep.subr.bf16.mxu0 0
        %475 = vmatpush1.bf16.xpose.msra.mxu0 0
        %476 = vmatprep.subr.bf16.mxu0 0
        %477 = vmatpush1.bf16.xpose.msra.mxu0 0
        %478 = vmatprep.subr.bf16.mxu0 0
        %479 = vmatpush1.bf16.xpose.msra.mxu0 0
        %480 = vmatprep.subr.bf16.mxu0 0
        %481 = vmatpush1.bf16.xpose.msra.mxu0 0
        %482 = vmatprep.subr.bf16.mxu0 0
        %483 = vmatpush1.bf16.xpose.msra.mxu0 0
        %484 = vmatprep.subr.bf16.mxu0 0
        %485 = vmatpush1.bf16.xpose.msra.mxu0 0
        %486 = vmatprep.subr.bf16.mxu0 0
        %487 = vmatpush1.bf16.xpose.msra.mxu0 0
        %488 = vmatprep.mubr.bf16.mxu0 0
        %489 = vmatmul.mubr.bf16.gmra.mrb[0].mxu0 %v451
        %v490 = vpop.f32.mrb[0].mxu0
        %v491 = vadd.f32 0.0, %v490
        %v492 = vpop.f32.mrb[0].mxu0
        %v493 = vpop.f32.mrb[0].mxu0
        %v494 = vpop.f32.mrb[0].mxu0
        %495 = vdwg.mxu0
        %496 = vrot.lane.b32.xlu0 %v435, 64
        %v497 = vpop.permute.xlu0 %496
        %v499 = vsel %vm449, %v435, 0
        %v502 = vsel %vm449, %v497, 0
        %504 = vmatprep.subr.bf16.mxu0 0
        %505 = vmatpush1.bf16.xpose.msra.mxu0 %v502
        %506 = vmatprep.subr.bf16.mxu0 0
        %507 = vmatpush1.bf16.xpose.msra.mxu0 0
        %508 = vmatprep.subr.bf16.mxu0 0
        %509 = vmatpush1.bf16.xpose.msra.mxu0 0
        %510 = vmatprep.subr.bf16.mxu0 0
        %511 = vmatpush1.bf16.xpose.msra.mxu0 0
        %512 = vmatprep.subr.bf16.mxu0 0
        %513 = vmatpush1.bf16.xpose.msra.mxu0 0
        %514 = vmatprep.subr.bf16.mxu0 0
        %515 = vmatpush1.bf16.xpose.msra.mxu0 0
        %516 = vmatprep.subr.bf16.mxu0 0
        %517 = vmatpush1.bf16.xpose.msra.mxu0 0
        %518 = vmatprep.subr.bf16.mxu0 0
        %519 = vmatpush1.bf16.xpose.msra.mxu0 0
        %520 = vmatprep.subr.bf16.mxu0 0
        %521 = vmatpush1.bf16.xpose.msra.mxu0 0
        %522 = vmatprep.subr.bf16.mxu0 0
        %523 = vmatpush1.bf16.xpose.msra.mxu0 0
        %524 = vmatprep.subr.bf16.mxu0 0
        %525 = vmatpush1.bf16.xpose.msra.mxu0 0
        %526 = vmatprep.subr.bf16.mxu0 0
        %527 = vmatpush1.bf16.xpose.msra.mxu0 0
        %528 = vmatprep.subr.bf16.mxu0 0
        %529 = vmatpush1.bf16.xpose.msra.mxu0 0
        %530 = vmatprep.subr.bf16.mxu0 0
        %531 = vmatpush1.bf16.xpose.msra.mxu0 0
        %532 = vmatprep.subr.bf16.mxu0 0
        %533 = vmatpush1.bf16.xpose.msra.mxu0 0
        %534 = vmatprep.subr.bf16.mxu0 0
        %535 = vmatpush1.bf16.xpose.msra.mxu0 0
        %536 = vmatprep.mubr.bf16.mxu0 0
        %537 = vmatmul.mubr.bf16.gmra.mrb[0].mxu0 %v499
        %v538 = vpop.f32.mrb[0].mxu0
        %v539 = vadd.f32 0.0, %v538
        %v540 = vpop.f32.mrb[0].mxu0
        %v541 = vpop.f32.mrb[0].mxu0
        %v542 = vpop.f32.mrb[0].mxu0
        %543 = vdwg.mxu0
        %544 = vrot.lane.b32.xlu0 %v437, 64
        %v545 = vpop.permute.xlu0 %544
        %v547 = vsel %vm449, %v437, 0
        %v550 = vsel %vm449, %v545, 0
        %552 = vmatprep.subr.bf16.mxu0 0
        %553 = vmatpush1.bf16.xpose.msra.mxu0 %v550
        %554 = vmatprep.subr.bf16.mxu0 0
        %555 = vmatpush1.bf16.xpose.msra.mxu0 0
        %556 = vmatprep.subr.bf16.mxu0 0
        %557 = vmatpush1.bf16.xpose.msra.mxu0 0
        %558 = vmatprep.subr.bf16.mxu0 0
        %559 = vmatpush1.bf16.xpose.msra.mxu0 0
        %560 = vmatprep.subr.bf16.mxu0 0
        %561 = vmatpush1.bf16.xpose.msra.mxu0 0
        %562 = vmatprep.subr.bf16.mxu0 0
        %563 = vmatpush1.bf16.xpose.msra.mxu0 0
        %564 = vmatprep.subr.bf16.mxu0 0
        %565 = vmatpush1.bf16.xpose.msra.mxu0 0
        %566 = vmatprep.subr.bf16.mxu0 0
        %567 = vmatpush1.bf16.xpose.msra.mxu0 0
        %568 = vmatprep.subr.bf16.mxu0 0
        %569 = vmatpush1.bf16.xpose.msra.mxu0 0
        %570 = vmatprep.subr.bf16.mxu0 0
        %571 = vmatpush1.bf16.xpose.msra.mxu0 0
        %572 = vmatprep.subr.bf16.mxu0 0
        %573 = vmatpush1.bf16.xpose.msra.mxu0 0
        %574 = vmatprep.subr.bf16.mxu0 0
        %575 = vmatpush1.bf16.xpose.msra.mxu0 0
        %576 = vmatprep.subr.bf16.mxu0 0
        %577 = vmatpush1.bf16.xpose.msra.mxu0 0
        %578 = vmatprep.subr.bf16.mxu0 0
        %579 = vmatpush1.bf16.xpose.msra.mxu0 0
        %580 = vmatprep.subr.bf16.mxu0 0
        %581 = vmatpush1.bf16.xpose.msra.mxu0 0
        %582 = vmatprep.subr.bf16.mxu0 0
        %583 = vmatpush1.bf16.xpose.msra.mxu0 0
        %584 = vmatprep.mubr.bf16.mxu0 0
        %585 = vmatmul.mubr.bf16.gmra.mrb[0].mxu0 %v547
        %v586 = vpop.f32.mrb[0].mxu0
        %v587 = vadd.f32 0.0, %v586
        %v588 = vpop.f32.mrb[0].mxu0
        %v589 = vpop.f32.mrb[0].mxu0
        %v590 = vpop.f32.mrb[0].mxu0
        %591 = vdwg.mxu0
        %592 = vrot.lane.b32.xlu0 %v439, 64
        %v593 = vpop.permute.xlu0 %592
        %v595 = vsel %vm449, %v439, 0
        %v598 = vsel %vm449, %v593, 0
        %600 = vmatprep.subr.bf16.mxu0 0
        %601 = vmatpush1.bf16.xpose.msra.mxu0 %v598
        %602 = vmatprep.subr.bf16.mxu0 0
        %603 = vmatpush1.bf16.xpose.msra.mxu0 0
        %604 = vmatprep.subr.bf16.mxu0 0
        %605 = vmatpush1.bf16.xpose.msra.mxu0 0
        %606 = vmatprep.subr.bf16.mxu0 0
        %607 = vmatpush1.bf16.xpose.msra.mxu0 0
        %608 = vmatprep.subr.bf16.mxu0 0
        %609 = vmatpush1.bf16.xpose.msra.mxu0 0
        %610 = vmatprep.subr.bf16.mxu0 0
        %611 = vmatpush1.bf16.xpose.msra.mxu0 0
        %612 = vmatprep.subr.bf16.mxu0 0
        %613 = vmatpush1.bf16.xpose.msra.mxu0 0
        %614 = vmatprep.subr.bf16.mxu0 0
        %615 = vmatpush1.bf16.xpose.msra.mxu0 0
        %616 = vmatprep.subr.bf16.mxu0 0
        %617 = vmatpush1.bf16.xpose.msra.mxu0 0
        %618 = vmatprep.subr.bf16.mxu0 0
        %619 = vmatpush1.bf16.xpose.msra.mxu0 0
        %620 = vmatprep.subr.bf16.mxu0 0
        %621 = vmatpush1.bf16.xpose.msra.mxu0 0
        %622 = vmatprep.subr.bf16.mxu0 0
        %623 = vmatpush1.bf16.xpose.msra.mxu0 0
        %624 = vmatprep.subr.bf16.mxu0 0
        %625 = vmatpush1.bf16.xpose.msra.mxu0 0
        %626 = vmatprep.subr.bf16.mxu0 0
        %627 = vmatpush1.bf16.xpose.msra.mxu0 0
        %628 = vmatprep.subr.bf16.mxu0 0
        %629 = vmatpush1.bf16.xpose.msra.mxu0 0
        %630 = vmatprep.subr.bf16.mxu0 0
        %631 = vmatpush1.bf16.xpose.msra.mxu0 0
        %632 = vmatprep.mubr.bf16.mxu0 0
        %633 = vmatmul.mubr.bf16.gmra.mrb[0].mxu0 %v595
        %v634 = vpop.f32.mrb[0].mxu0
        %v635 = vadd.f32 0.0, %v634
        %v636 = vpop.f32.mrb[0].mxu0
        %v637 = vpop.f32.mrb[0].mxu0
        %v638 = vpop.f32.mrb[0].mxu0
        %639 = vdwg.mxu0
        %vm640 = vcmask 64512
        %v641 = vsel %vm640, %v491, -inf
        %642 = vmax.xlane.f32.xlu0 %v641
        %v643 = vpop.xlane.xlu0 %642
        %v644 = vsel %vm640, %v539, -inf
        %645 = vmax.xlane.f32.xlu0 %v644
        %v646 = vpop.xlane.xlu0 %645
        %v647 = vsel %vm640, %v587, -inf
        %648 = vmax.xlane.f32.xlu0 %v647
        %v649 = vpop.xlane.xlu0 %648
        %v650 = vsel %vm640, %v635, -inf
        %651 = vmax.xlane.f32.xlu0 %v650
        %v652 = vpop.xlane.xlu0 %651
        %v653 = vsub.f32 %v491, %v643
        %v654 = vsub.f32 %v539, %v646
        %v655 = vsub.f32 %v587, %v649
        %v656 = vsub.f32 %v635, %v652
        %v657 = vpack.c.bf16 %v653, %v653
        %v658 = vpack.c.bf16 %v654, %v654
        %v659 = vpack.c.bf16 %v655, %v655
        %v660 = vpack.c.bf16 %v656, %v656
        %v662 = vmul.bf16 %v657, 1069105081
        %v663 = vpow.bf16.pop %v662
        %v665 = vmul.bf16 %v658, 1069105081
        %v666 = vpow.bf16.pop %v665
        %v668 = vmul.bf16 %v659, 1069105081
        %v669 = vpow.bf16.pop %v668
        %v671 = vmul.bf16 %v660, 1069105081
        %v672 = vpow.bf16.pop %v671
        %v673 = vunpack.c.l.bf16 %v663
        %v674 = vunpack.c.l.bf16 %v666
        %v675 = vunpack.c.l.bf16 %v669
        %v676 = vunpack.c.l.bf16 %v672
        %v677 = vsel %vm640, %v673, 0.0
        %678 = vadd.xlane.f32.xlu0 %v677
        %v679 = vpop.xlane.xlu0 %678
        %v680 = vsel %vm640, %v674, 0.0
        %681 = vadd.xlane.f32.xlu0 %v680
        %v682 = vpop.xlane.xlu0 %681
        %v683 = vsel %vm640, %v675, 0.0
        %684 = vadd.xlane.f32.xlu0 %v683
        %v685 = vpop.xlane.xlu0 %684
        %v686 = vsel %vm640, %v676, 0.0
        %687 = vadd.xlane.f32.xlu0 %v686
        %v688 = vpop.xlane.xlu0 %687
        %v690 = vsel %vm640, %v663, 0
        %vm692 = vcmask 1043456
        %v694 = vsel %vm692, %v432, 0
        %696 = vmatprep.subr.bf16.mxu0 0
        %697 = vmatpush1.bf16.msra.mxu0 %v694
        %698 = vmatprep.subr.bf16.mxu0 0
        %699 = vmatpush1.bf16.msra.mxu0 0
        %700 = vmatprep.subr.bf16.mxu0 0
        %701 = vmatpush1.bf16.msra.mxu0 0
        %702 = vmatprep.subr.bf16.mxu0 0
        %703 = vmatpush1.bf16.msra.mxu0 0
        %704 = vmatprep.subr.bf16.mxu0 0
        %705 = vmatpush1.bf16.msra.mxu0 0
        %706 = vmatprep.subr.bf16.mxu0 0
        %707 = vmatpush1.bf16.msra.mxu0 0
        %708 = vmatprep.subr.bf16.mxu0 0
        %709 = vmatpush1.bf16.msra.mxu0 0
        %710 = vmatprep.subr.bf16.mxu0 0
        %711 = vmatpush1.bf16.msra.mxu0 0
        %712 = vmatprep.subr.bf16.mxu0 0
        %713 = vmatpush1.bf16.msra.mxu0 0
        %714 = vmatprep.subr.bf16.mxu0 0
        %715 = vmatpush1.bf16.msra.mxu0 0
        %716 = vmatprep.subr.bf16.mxu0 0
        %717 = vmatpush1.bf16.msra.mxu0 0
        %718 = vmatprep.subr.bf16.mxu0 0
        %719 = vmatpush1.bf16.msra.mxu0 0
        %720 = vmatprep.subr.bf16.mxu0 0
        %721 = vmatpush1.bf16.msra.mxu0 0
        %722 = vmatprep.subr.bf16.mxu0 0
        %723 = vmatpush1.bf16.msra.mxu0 0
        %724 = vmatprep.subr.bf16.mxu0 0
        %725 = vmatpush1.bf16.msra.mxu0 0
        %726 = vmatprep.subr.bf16.mxu0 0
        %727 = vmatpush1.bf16.msra.mxu0 0
        %728 = vmatprep.mubr.bf16.mxu0 0
        %729 = vmatmul.mubr.bf16.gmra.mrb[0].mxu0 %v690
        %v730 = vpop.f32.mrb[0].mxu0
        %v731 = vadd.f32 0.0, %v730
        %v732 = vpop.f32.mrb[0].mxu0
        %v733 = vpop.f32.mrb[0].mxu0
        %v734 = vpop.f32.mrb[0].mxu0
        %735 = vdwg.mxu0
        %v737 = vsel %vm640, %v666, 0
        %v740 = vsel %vm692, %v442, 0
        %742 = vmatprep.subr.bf16.mxu0 0
        %743 = vmatpush1.bf16.msra.mxu0 %v740
        %744 = vmatprep.subr.bf16.mxu0 0
        %745 = vmatpush1.bf16.msra.mxu0 0
        %746 = vmatprep.subr.bf16.mxu0 0
        %747 = vmatpush1.bf16.msra.mxu0 0
        %748 = vmatprep.subr.bf16.mxu0 0
        %749 = vmatpush1.bf16.msra.mxu0 0
        %750 = vmatprep.subr.bf16.mxu0 0
        %751 = vmatpush1.bf16.msra.mxu0 0
        %752 = vmatprep.subr.bf16.mxu0 0
        %753 = vmatpush1.bf16.msra.mxu0 0
        %754 = vmatprep.subr.bf16.mxu0 0
        %755 = vmatpush1.bf16.msra.mxu0 0
        %756 = vmatprep.subr.bf16.mxu0 0
        %757 = vmatpush1.bf16.msra.mxu0 0
        %758 = vmatprep.subr.bf16.mxu0 0
        %759 = vmatpush1.bf16.msra.mxu0 0
        %760 = vmatprep.subr.bf16.mxu0 0
        %761 = vmatpush1.bf16.msra.mxu0 0
        %762 = vmatprep.subr.bf16.mxu0 0
        %763 = vmatpush1.bf16.msra.mxu0 0
        %764 = vmatprep.subr.bf16.mxu0 0
        %765 = vmatpush1.bf16.msra.mxu0 0
        %766 = vmatprep.subr.bf16.mxu0 0
        %767 = vmatpush1.bf16.msra.mxu0 0
        %768 = vmatprep.subr.bf16.mxu0 0
        %769 = vmatpush1.bf16.msra.mxu0 0
        %770 = vmatprep.subr.bf16.mxu0 0
        %771 = vmatpush1.bf16.msra.mxu0 0
        %772 = vmatprep.subr.bf16.mxu0 0
        %773 = vmatpush1.bf16.msra.mxu0 0
        %774 = vmatprep.mubr.bf16.mxu0 0
        %775 = vmatmul.mubr.bf16.gmra.mrb[0].mxu0 %v737
        %v776 = vpop.f32.mrb[0].mxu0
        %v777 = vadd.f32 0.0, %v776
        %v778 = vpop.f32.mrb[0].mxu0
        %v779 = vpop.f32.mrb[0].mxu0
        %v780 = vpop.f32.mrb[0].mxu0
        %781 = vdwg.mxu0
        %v783 = vsel %vm640, %v669, 0
        %v786 = vsel %vm692, %v444, 0
        %788 = vmatprep.subr.bf16.mxu0 0
        %789 = vmatpush1.bf16.msra.mxu0 %v786
        %790 = vmatprep.subr.bf16.mxu0 0
        %791 = vmatpush1.bf16.msra.mxu0 0
        %792 = vmatprep.subr.bf16.mxu0 0
        %793 = vmatpush1.bf16.msra.mxu0 0
        %794 = vmatprep.subr.bf16.mxu0 0
        %795 = vmatpush1.bf16.msra.mxu0 0
        %796 = vmatprep.subr.bf16.mxu0 0
        %797 = vmatpush1.bf16.msra.mxu0 0
        %798 = vmatprep.subr.bf16.mxu0 0
        %799 = vmatpush1.bf16.msra.mxu0 0
        %800 = vmatprep.subr.bf16.mxu0 0
        %801 = vmatpush1.bf16.msra.mxu0 0
        %802 = vmatprep.subr.bf16.mxu0 0
        %803 = vmatpush1.bf16.msra.mxu0 0
        %804 = vmatprep.subr.bf16.mxu0 0
        %805 = vmatpush1.bf16.msra.mxu0 0
        %806 = vmatprep.subr.bf16.mxu0 0
        %807 = vmatpush1.bf16.msra.mxu0 0
        %808 = vmatprep.subr.bf16.mxu0 0
        %809 = vmatpush1.bf16.msra.mxu0 0
        %810 = vmatprep.subr.bf16.mxu0 0
        %811 = vmatpush1.bf16.msra.mxu0 0
        %812 = vmatprep.subr.bf16.mxu0 0
        %813 = vmatpush1.bf16.msra.mxu0 0
        %814 = vmatprep.subr.bf16.mxu0 0
        %815 = vmatpush1.bf16.msra.mxu0 0
        %816 = vmatprep.subr.bf16.mxu0 0
        %817 = vmatpush1.bf16.msra.mxu0 0
        %818 = vmatprep.subr.bf16.mxu0 0
        %819 = vmatpush1.bf16.msra.mxu0 0
        %820 = vmatprep.mubr.bf16.mxu0 0
        %821 = vmatmul.mubr.bf16.gmra.mrb[0].mxu0 %v783
        %v822 = vpop.f32.mrb[0].mxu0
        %v823 = vadd.f32 0.0, %v822
        %v824 = vpop.f32.mrb[0].mxu0
        %v825 = vpop.f32.mrb[0].mxu0
        %v826 = vpop.f32.mrb[0].mxu0
        %827 = vdwg.mxu0
        %v829 = vsel %vm640, %v672, 0
        %v832 = vsel %vm692, %v446, 0
        %834 = vmatprep.subr.bf16.mxu0 0
        %835 = vmatpush1.bf16.msra.mxu0 %v832
        %836 = vmatprep.subr.bf16.mxu0 0
        %837 = vmatpush1.bf16.msra.mxu0 0
        %838 = vmatprep.subr.bf16.mxu0 0
        %839 = vmatpush1.bf16.msra.mxu0 0
        %840 = vmatprep.subr.bf16.mxu0 0
        %841 = vmatpush1.bf16.msra.mxu0 0
        %842 = vmatprep.subr.bf16.mxu0 0
        %843 = vmatpush1.bf16.msra.mxu0 0
        %844 = vmatprep.subr.bf16.mxu0 0
        %845 = vmatpush1.bf16.msra.mxu0 0
        %846 = vmatprep.subr.bf16.mxu0 0
        %847 = vmatpush1.bf16.msra.mxu0 0
        %848 = vmatprep.subr.bf16.mxu0 0
        %849 = vmatpush1.bf16.msra.mxu0 0
        %850 = vmatprep.subr.bf16.mxu0 0
        %851 = vmatpush1.bf16.msra.mxu0 0
        %852 = vmatprep.subr.bf16.mxu0 0
        %853 = vmatpush1.bf16.msra.mxu0 0
        %854 = vmatprep.subr.bf16.mxu0 0
        %855 = vmatpush1.bf16.msra.mxu0 0
        %856 = vmatprep.subr.bf16.mxu0 0
        %857 = vmatpush1.bf16.msra.mxu0 0
        %858 = vmatprep.subr.bf16.mxu0 0
        %859 = vmatpush1.bf16.msra.mxu0 0
        %860 = vmatprep.subr.bf16.mxu0 0
        %861 = vmatpush1.bf16.msra.mxu0 0
        %862 = vmatprep.subr.bf16.mxu0 0
        %863 = vmatpush1.bf16.msra.mxu0 0
        %864 = vmatprep.subr.bf16.mxu0 0
        %865 = vmatpush1.bf16.msra.mxu0 0
        %866 = vmatprep.mubr.bf16.mxu0 0
        %867 = vmatmul.mubr.bf16.gmra.mrb[0].mxu0 %v829
        %v868 = vpop.f32.mrb[0].mxu0
        %v869 = vadd.f32 0.0, %v868
        %v870 = vpop.f32.mrb[0].mxu0
        %v871 = vpop.f32.mrb[0].mxu0
        %v872 = vpop.f32.mrb[0].mxu0
        %873 = vdwg.mxu0
        %v874 = vrcp.pop %v679
        %v875 = vrcp.pop %v682
        %v876 = vrcp.pop %v685
        %v877 = vrcp.pop %v688
        %v878 = vmul.f32 %v731, %v874
        %v879 = vmul.f32 %v777, %v875
        %v880 = vmul.f32 %v823, %v876
        %v881 = vmul.f32 %v869, %v877
        %v882 = vpack.c.bf16 %v878, %v878
        %v883 = vpack.c.bf16 %v879, %v879
        %v884 = vpack.c.bf16 %v880, %v880
        %v885 = vpack.c.bf16 %v881, %v881
        %887 = vrot.lane.b32.xlu0 %v883, 16
        %v888 = vpop.permute.xlu0 %887
        %890 = vrot.lane.b32.xlu0 %v884, 32
        %v891 = vpop.permute.xlu0 %890
        %893 = vrot.lane.b32.xlu0 %v885, 48
        %v894 = vpop.permute.xlu0 %893
        %v897 = vsel %vm449, %v882, %v888
        %vm898 = vcmask 261120
        %v900 = vsel %vm898, %v897, %v891
        %vm901 = vcmask 392192
        %v903 = vsel %vm901, %v900, %v894
        %v904 = vld [vmem:[#allocation7] sm:$0xf]
        %v905 = vld [vmem:[#allocation7 + $0x4] sm:$0xf]
        %v906 = vld [vmem:[#allocation7 + $0x8] sm:$0xf]
        %v907 = vld [vmem:[#allocation7 + $0xc] sm:$0xf]
        %v908 = vld [vmem:[#allocation7 + $0x10] sm:$0xf]
        %v909 = vld [vmem:[#allocation7 + $0x14] sm:$0xf]
        %v910 = vld [vmem:[#allocation7 + $0x18] sm:$0xf]
        %v911 = vld [vmem:[#allocation7 + $0x1c] sm:$0xf]
        %v912 = vld [vmem:[%s4] sm:$0x1]
        %v914 = vlaneseq
        %v915 = vshrl.u32 %v914, 7
        %v916 = vsub.s32 0, %v915
        %v917 = vrot.slane %v912, %v916
        %v927 = vunpack.c.l.b16 %v904
        %v928 = vunpack.c.l.b16 %v905
        %v929 = vunpack.c.l.b16 %v906
        %v930 = vunpack.c.l.b16 %v907
        %v931 = vunpack.c.l.b16 %v908
        %v932 = vunpack.c.l.b16 %v909
        %v933 = vunpack.c.l.b16 %v910
        %v934 = vunpack.c.l.b16 %v911
        %v935 = vpack.c.b16 %v928, %v927
        %v936 = vpack.c.b16 %v930, %v929
        %v937 = vpack.c.b16 %v932, %v931
        %v938 = vpack.c.b16 %v934, %v933
        %v943 = vsel %vm386, %v903, 0
        %945 = vmatprep.subr.bf16.mxu0 0
        %946 = vmatpush1.bf16.msra.mxu0 %v935
        %947 = vmatprep.subr.bf16.mxu0 0
        %948 = vmatpush1.bf16.msra.mxu0 %v936
        %949 = vmatprep.subr.bf16.mxu0 0
        %950 = vmatpush1.bf16.msra.mxu0 %v937
        %951 = vmatprep.subr.bf16.mxu0 0
        %952 = vmatpush1.bf16.msra.mxu0 %v938
        %953 = vmatprep.subr.bf16.mxu0 0
        %954 = vmatpush1.bf16.msra.mxu0 0
        %955 = vmatprep.subr.bf16.mxu0 0
        %956 = vmatpush1.bf16.msra.mxu0 0
        %957 = vmatprep.subr.bf16.mxu0 0
        %958 = vmatpush1.bf16.msra.mxu0 0
        %959 = vmatprep.subr.bf16.mxu0 0
        %960 = vmatpush1.bf16.msra.mxu0 0
        %961 = vmatprep.subr.bf16.mxu0 0
        %962 = vmatpush1.bf16.msra.mxu0 0
        %963 = vmatprep.subr.bf16.mxu0 0
        %964 = vmatpush1.bf16.msra.mxu0 0
        %965 = vmatprep.subr.bf16.mxu0 0
        %966 = vmatpush1.bf16.msra.mxu0 0
        %967 = vmatprep.subr.bf16.mxu0 0
        %968 = vmatpush1.bf16.msra.mxu0 0
        %969 = vmatprep.subr.bf16.mxu0 0
        %970 = vmatpush1.bf16.msra.mxu0 0
        %971 = vmatprep.subr.bf16.mxu0 0
        %972 = vmatpush1.bf16.msra.mxu0 0
        %973 = vmatprep.subr.bf16.mxu0 0
        %974 = vmatpush1.bf16.msra.mxu0 0
        %975 = vmatprep.subr.bf16.mxu0 0
        %976 = vmatpush1.bf16.msra.mxu0 0
        %977 = vmatprep.mubr.bf16.mxu0 0
        %978 = vmatmul.mubr.bf16.gmra.mrb[0].mxu0 %v943
        %v979 = vpop.f32.mrb[0].mxu0
        %v980 = vadd.f32 %v917, %v979
        %v981 = vpop.f32.mrb[0].mxu0
        %v982 = vpop.f32.mrb[0].mxu0
        %v983 = vpop.f32.mrb[0].mxu0
        %984 = vdwg.mxu0
        %v985 = vadd.f32 %v980, %v324
        %v986 = vsel %vm386, %v985, 0.0
        %987 = vadd.xlane.f32.xlu0 %v986
        %v988 = vpop.xlane.xlu0 %987
        %v989 = vrcp.pop 64.0
        %v990 = vmul.f32 %v988, %v989
        %v991 = vsub.f32 %v985, %v990
        %v992 = vmul.f32 %v991, %v991
        %v993 = vsel %vm386, %v992, 0.0
        %994 = vadd.xlane.f32.xlu0 %v993
        %v995 = vpop.xlane.xlu0 %994
        %v996 = vmul.f32 %v995, %v989
        %v997 = vadd.f32 %v996, 1e-05
        %v998 = vrsqrt.pop %v997
        %v999 = vmul.f32 %v991, %v998
        %v1000 = vld [vmem:[%s5] sm:$0x1]
        %v1002 = vlaneseq
        %v1003 = vshrl.u32 %v1002, 7
        %v1004 = vsub.s32 0, %v1003
        %v1005 = vrot.slane %v1000, %v1004
        %v1007 = vmul.f32 %v999, %v1005
        %v1008 = vld [vmem:[%s6] sm:$0x1]
        %v1010 = vlaneseq
        %v1011 = vshrl.u32 %v1010, 7
        %v1012 = vsub.s32 0, %v1011
        %v1013 = vrot.slane %v1008, %v1012
        %v1015 = vadd.f32 %v1007, %v1013
        %1016 = vst.msk [vmem:[%s322] sm:$0xff] %vm386, %v1015
        %s1017 = sand.u32 %s185, 1
        %s1018 = scalar_lea.sflag [#allocation4], %s1017
        %s1019 = sand.u32 %s185, 1
        %s1020 = smul.addr %s1019, 8
        %s1021 = scalar_lea.vmem [#allocation8], %s1020
        // Predicated region
        $region61: #{tpu_custom_call.1} parent=47 // pred_check
          %p1022 = pneg %p195
        $region62: #{tpu_custom_call.1} parent=47 // pred_check_branch
          %1024 = sbr.rel (%p1022) target = $region64
        $region63: #{tpu_custom_call.1} parent=47 // pred_region
          %s1026 = ssub.s32 128, 128
          %1027 = vsyncadd %s1018, %s1026
          %s1028 = smul.addr %s25, 128
          %s1029 = scalar_lea.hbm %s7, %s1028
          %s1031 = sshll.u32 %s1021, 4
          %s1032 = int_to_ptr.vmem [resolvable:$true] %s1031
          %1034 = dma.vmem_to_hbm [thread:$0]  %s1032, 128, %s1029, %s1018
        $region64: #{tpu_custom_call.1} parent=47 // pred_fallthru
          _
      $region48: #{tpu_custom_call.1} parent=5 // pred_fallthru
        _
      %p1035 = scmp.le.s32.totalorder 2, %s20
      // Predicated region
      $region65: #{tpu_custom_call.1} parent=5 // pred_check
        %p1036 = pneg %p1035
      $region66: #{tpu_custom_call.1} parent=5 // pred_check_branch
        %1038 = sbr.rel (%p1036) target = $region68
      $region67: #{tpu_custom_call.1} parent=5 // pred_region
        %s1039 = ssub.s32 %s20, 2
        // Predicated region
        $region69: #{tpu_custom_call.1} parent=67 // pred_check
          %p1040 = pneg %p201
        $region70: #{tpu_custom_call.1} parent=67 // pred_check_branch
          %1042 = sbr.rel (%p1040) target = $region72
        $region71: #{tpu_custom_call.1} parent=67 // pred_region
          %s1043 = sand.u32 %s186, 1
          %s1044 = scalar_lea.sflag [#allocation4], %s1043
          %s1045 = sand.u32 %s186, 1
          %s1046 = smul.addr %s1045, 8
          %s1047 = scalar_lea.vmem [#allocation8], %s1046
          %1048 = dma.done %s1044, 128
        $region72: #{tpu_custom_call.1} parent=67 // pred_fallthru
          _
      $region68: #{tpu_custom_call.1} parent=5 // pred_fallthru
        _
    $region6: #{tpu_custom_call.1} parent=1 // loop_footer
      %s24 = sadd.s32 1, %s20
    $region7: #{tpu_custom_call.1} parent=1 // loop_footer_branch
      %19 = sbr.rel target = $region3
    $region8: #{tpu_custom_call.1} parent=1 // loop_exit
      _
    %1049 = vsyncpa [#allocation3], 1
    %s1050 = scalar_lea.sflag [#allocation3], 1
    %1051 = vsyncpa %s1050, 1
    %1052 = vsyncpa [#allocation6], 1
    %1053 = vsyncpa [#allocation4], 1
    %s1054 = scalar_lea.sflag [#allocation4], 1
    %1055 = vsyncpa %s1054, 1

</llo_original>
